<compile_context>
chip_gen: v6e
topology: v6e:2x2x1
jax: 0.10.0
libtpu: 0.0.40
codegen_flags: <defaults>
</compile_context>

<pallas_src>
import functools

import jax
import jax.numpy as jnp
from jax.experimental import pallas as pl
from jax.experimental.pallas import tpu as pltpu


def conv_block_kernel(x_ref, w_ref, b_ref, o_ref, *, chunk):
    """One grid step: Nb batch elements, NCL layout.

    x_ref : (Nb, C_in, L)      input block (channels on sublanes, length on lanes)
    w_ref : (C_out, 3*C_in)    fused conv weight, columns ordered [tap0 | tap1 | tap2]
    b_ref : (C_out, 1)         bias (f32)
    o_ref : (Nb, C_out, L//4)  output block (after maxpool + bias + relu)
    """
    Nb, _, L = x_ref.shape
    pchunk = chunk // 4
    n_chunks = L // chunk

    w = w_ref[...]                                    # (C_out, 3*C_in)
    bias = b_ref[...]                                 # (C_out, 1), f32

    # Exact 0/1 selection matrix picking every 4th lane, built in-kernel from
    # 2-D iotas (removes the old 256 KiB HBM `sel` input entirely).
    row = jax.lax.broadcasted_iota(jnp.int32, (chunk, pchunk), 0)
    col = jax.lax.broadcasted_iota(jnp.int32, (chunk, pchunk), 1)
    sel = (row == 4 * col).astype(jnp.float32)        # (chunk, chunk//4)

    def shift_left(a, s):
        # out[:, i] = a[:, i + s]; trailing s columns are zero-filled (those
        # columns are never picked up by the selected pool outputs).
        return jnp.concatenate([a[:, s:], jnp.zeros_like(a[:, :s])], axis=1)

    for j in range(Nb):                               # Nb is small and static
        x = x_ref[j]                                  # (C_in, L), compute dtype
        zcol = jnp.zeros_like(x[:, :1])
        x_m1 = jnp.concatenate([zcol, x[:, :L - 1]], axis=1)   # x[:, l-1], 0 at l=0
        x_p1 = jnp.concatenate([x[:, 1:], zcol], axis=1)       # x[:, l+1], 0 at l=L-1
        xs = jnp.concatenate([x_m1, x, x_p1], axis=0)          # (3*C_in, L)

        # Fused conv: one MXU matmul (K = 3*C_in), f32 accumulation.
        y = jnp.dot(w, xs, preferred_element_type=jnp.float32)  # (C_out, L) f32

        # MaxPool1d(4,4), step 1: column 4p of m == max(y[:, 4p:4p+4]).
        m = jnp.maximum(y, shift_left(y, 1))
        m = jnp.maximum(m, shift_left(m, 2))

        # Step 2: compact columns 0, 4, 8, ... with the exact selection matmul;
        # chunked so each store is <=128 lanes wide (lane-dense for large L).
        # Bias after pool (exact) + ReLU, all in f32, cast only at the store.
        for c in range(n_chunks):
            pooled = jnp.dot(m[:, c * chunk:(c + 1) * chunk], sel,
                             preferred_element_type=jnp.float32)
            out_c = jnp.maximum(pooled + bias, 0.0).astype(o_ref.dtype)
            o_ref[j, :, c * pchunk:(c + 1) * pchunk] = out_c


def _pick_batch_block(n, c_in, itemsize):
    """Largest divisor of n that (roughly) fills a vreg's sublanes with
    channels*batch while keeping >= 2 grid steps (megacore) whenever n allows."""
    sublanes = max(1, 32 // itemsize)          # 8 for f32, 16 for bf16
    target = max(1, sublanes // max(c_in, 1))
    best = 1
    for nb in range(1, n + 1):
        if n % nb == 0 and nb <= target and n // nb >= min(2, n):
            best = nb
    return best


def _pick_chunk(length, max_sel_chunk):
    """Largest divisor of `length` that is a multiple of 4 and <= max_sel_chunk."""
    best = 4
    for c in range(4, min(length, max_sel_chunk) + 1, 4):
        if length % c == 0:
            best = c
    return best


def conv_block(x, w, b, *, compute_dtype=jnp.float32, max_sel_chunk=512,
               batch_block=None):
    """x: (N, C_in, L) (PyTorch NCL); w: (C_out, C_in, 3); b: (C_out,).

    Returns float32 (N, C_out, L // 4), matching
    nn.Sequential(Conv1d(C_in, C_out, 3, padding=1), MaxPool1d(4, 4), ReLU()).
    """
    N, C_in, L = x.shape
    C_out = w.shape[0]
    assert L % 4 == 0
    Lp = L // 4

    itemsize = jnp.dtype(compute_dtype).itemsize
    Nb = batch_block if batch_block is not None else _pick_batch_block(N, C_in, itemsize)
    assert N % Nb == 0
    chunk = _pick_chunk(L, max_sel_chunk)
    pchunk = chunk // 4

    # Tiny parameter-side rearrangements only; activations stay in NCL and are
    # never transposed or padded in HBM.  Fused weight columns: [tap0 | tap1 | tap2].
    w_fused = jnp.transpose(w, (0, 2, 1)).reshape(C_out, 3 * C_in)
    b2 = b.reshape(C_out, 1).astype(jnp.float32)

    x_c = x.astype(compute_dtype)
    w_c = w_fused.astype(compute_dtype)

    # Explicit VMEM budget from actual block sizes (double-buffered in/out blocks
    # + in-kernel intermediates), clamped to stay safe on v7x's 64 MiB VMEM.
    x_blk = Nb * C_in * L * itemsize
    out_blk = Nb * C_out * Lp * 4
    params = C_out * 3 * C_in * itemsize + C_out * 4
    interm = 3 * C_in * L * itemsize + 3 * C_out * L * 4 + chunk * pchunk * 4
    vmem_limit = int(min(48 << 20,
                         max(16 << 20, 2 * (2 * (x_blk + out_blk + params) + interm))))

    kernel = functools.partial(conv_block_kernel, chunk=chunk)

    return pl.pallas_call(
        kernel,
        out_shape=jax.ShapeDtypeStruct((N, C_out, Lp), jnp.float32),
        grid_spec=pltpu.PrefetchScalarGridSpec(
            num_scalar_prefetch=0,
            grid=(N // Nb,),   # batch-block steps; "parallel" for megacore sharding
            in_specs=[
                pl.BlockSpec((Nb, C_in, L), lambda n: (n, 0, 0)),
                pl.BlockSpec((C_out, 3 * C_in), lambda n: (0, 0)),
                pl.BlockSpec((C_out, 1), lambda n: (0, 0)),
            ],
            out_specs=pl.BlockSpec((Nb, C_out, Lp), lambda n: (n, 0, 0)),
        ),
        compiler_params=pltpu.CompilerParams(
            dimension_semantics=("parallel",),
            vmem_limit_bytes=vmem_limit,
        ),
    )(x_c, w_c, b2)


def conv_block_reference(x, w, b):
    """Plain-JAX reference matching the PyTorch module semantics."""
    N, C_in, L = x.shape
    C_out = w.shape[0]
    xp = jnp.pad(x, ((0, 0), (0, 0), (1, 1)))
    y = b[None, :, None]
    for k in range(3):
        y = y + jnp.einsum("ncl,oc->nol", xp[:, :, k:k + L], w[:, :, k])
    y = y.reshape(N, C_out, L // 4, 4).max(axis=-1)
    return jnp.maximum(y, 0.0)


if __name__ == "__main__":
    # Small shapes consistent with the module: batch=2, in_channels=4,
    # out_channels=8, length=16.
    N, C_in, C_out, L = 2, 4, 8, 16

    key = jax.random.PRNGKey(0)
    kx, kw, kb = jax.random.split(key, 3)
    x = jax.random.normal(kx, (N, C_in, L), dtype=jnp.float32)
    # Deterministic synthetic parameters (shapes from nn.Conv1d(C_in, C_out, 3)).
    w = jax.random.normal(kw, (C_out, C_in, 3), dtype=jnp.float32) * 0.2
    b = jax.random.normal(kb, (C_out,), dtype=jnp.float32) * 0.1

    ref = jax.block_until_ready(conv_block_reference(x, w, b))

    # f32 path (matches the PyTorch module's f32 forward).
    out = jax.block_until_ready(conv_block(x, w, b))
    assert out.shape == (N, C_out, L // 4), out.shape
    assert jnp.allclose(out, ref, atol=1e-5, rtol=1e-5), (
        float(jnp.max(jnp.abs(out - ref))))

    # bf16 compute path (memory-bound kernel: halves HBM traffic); f32 accumulate
    # and f32 post-matmul math, so only input-rounding error -> loose tolerance.
    out_bf = jax.block_until_ready(conv_block(x, w, b, compute_dtype=jnp.bfloat16))
    assert out_bf.shape == (N, C_out, L // 4), out_bf.shape
    assert jnp.allclose(out_bf, ref, atol=7e-2, rtol=5e-2), (
        float(jnp.max(jnp.abs(out_bf - ref))))

    # Slightly larger config exercising batch blocking (Nb=2) and the chunked,
    # 128-lane-wide (lane-dense) pooled stores.
    N2, L2 = 8, 1024
    x2 = jax.random.normal(kx, (N2, C_in, L2), dtype=jnp.float32)
    ref2 = jax.block_until_ready(conv_block_reference(x2, w, b))
    out2 = jax.block_until_ready(conv_block(x2, w, b))
    assert out2.shape == (N2, C_out, L2 // 4), out2.shape
    assert jnp.allclose(out2, ref2, atol=1e-4, rtol=1e-4), (
        float(jnp.max(jnp.abs(out2 - ref2))))

    print("KERNEL_OK")
</pallas_src>

<mosaic_0001>
module attributes {stable_mosaic.version = 11 : i64} {
  func.func @conv_block_kernel(%arg0: i32, %arg1: memref<1x4x16xf32, #tpu.memory_space<vmem>>, %arg2: memref<8x12xf32, #tpu.memory_space<vmem>>, %arg3: memref<8x1xf32, #tpu.memory_space<vmem>>, %arg4: memref<1x8x4xf32, #tpu.memory_space<vmem>>) attributes {dimension_semantics = [#tpu.dimension_semantics<parallel>], iteration_bounds = array<i64: 2>, scalar_prefetch = 0 : i64, scratch_operands = 0 : i64, tpu.core_type = #tpu.core_type<tc>, window_params = [{transform_indices = @transform_0, window_bounds = array<i64: 1, 4, 16>}, {pipeline_mode = #tpu.pipeline_mode<synchronous>, transform_indices = @transform_1, window_bounds = array<i64: 8, 12>}, {pipeline_mode = #tpu.pipeline_mode<synchronous>, transform_indices = @transform_2, window_bounds = array<i64: 8, 1>}, {transform_indices = @transform_3, window_bounds = array<i64: 1, 8, 4>}]} {
    %c0 = arith.constant 0 : index
    %c0_0 = arith.constant 0 : index
    %0 = vector.load %arg2[%c0, %c0_0] : memref<8x12xf32, #tpu.memory_space<vmem>>, vector<8x12xf32>
    %c0_1 = arith.constant 0 : index
    %c0_2 = arith.constant 0 : index
    %1 = vector.load %arg3[%c0_1, %c0_2] : memref<8x1xf32, #tpu.memory_space<vmem>>, vector<8x1xf32>
    %2 = tpu.iota {dimensions = array<i32: 0>} : vector<16x4xi32>
    %3 = tpu.iota {dimensions = array<i32: 1>} : vector<16x4xi32>
    %c4_i32 = arith.constant 4 : i32
    %4 = vector.broadcast %c4_i32 : i32 to vector<16x4xi32>
    %5 = arith.muli %4, %3 : vector<16x4xi32>
    %6 = arith.cmpi eq, %2, %5 : vector<16x4xi32>
    %7 = arith.extui %6 : vector<16x4xi1> to vector<16x4xi32>
    %8 = arith.sitofp %7 : vector<16x4xi32> to vector<16x4xf32>
    %c0_3 = arith.constant 0 : index
    %c0_4 = arith.constant 0 : index
    %c0_5 = arith.constant 0 : index
    %9 = vector.load %arg1[%c0_3, %c0_4, %c0_5] : memref<1x4x16xf32, #tpu.memory_space<vmem>>, vector<1x4x16xf32>
    %10 = vector.shape_cast %9 : vector<1x4x16xf32> to vector<4x16xf32>
    %cst = arith.constant 0.000000e+00 : f32
    %11 = vector.broadcast %cst : f32 to vector<4x1xf32>
    %12 = vector.extract_strided_slice %10 {offsets = [0, 0], sizes = [4, 15], strides = [1, 1]} : vector<4x16xf32> to vector<4x15xf32>
    %13 = tpu.concatenate %11, %12 in 1 : vector<4x1xf32>, vector<4x15xf32> -> vector<4x16xf32>
    %14 = vector.extract_strided_slice %10 {offsets = [0, 1], sizes = [4, 15], strides = [1, 1]} : vector<4x16xf32> to vector<4x15xf32>
    %15 = tpu.concatenate %14, %11 in 1 : vector<4x15xf32>, vector<4x1xf32> -> vector<4x16xf32>
    %16 = tpu.concatenate %13, %10, %15 in 0 : vector<4x16xf32>, vector<4x16xf32>, vector<4x16xf32> -> vector<12x16xf32>
    %cst_6 = arith.constant dense<0.000000e+00> : vector<8x16xf32>
    %17 = tpu.matmul %0, %16, %cst_6 {dimension_numbers = #tpu.dot_dimension_numbers<[1], [0], [0], [1], [0, 0, 1, 1], [], []>} : vector<8x12xf32>, vector<12x16xf32>, vector<8x16xf32> -> vector<8x16xf32>
    %18 = vector.extract_strided_slice %17 {offsets = [0, 1], sizes = [8, 15], strides = [1, 1]} : vector<8x16xf32> to vector<8x15xf32>
    %cst_7 = arith.constant 0.000000e+00 : f32
    %19 = vector.broadcast %cst_7 : f32 to vector<8x1xf32>
    %20 = tpu.concatenate %18, %19 in 1 : vector<8x15xf32>, vector<8x1xf32> -> vector<8x16xf32>
    %21 = arith.maximumf %17, %20 : vector<8x16xf32>
    %22 = vector.extract_strided_slice %21 {offsets = [0, 2], sizes = [8, 14], strides = [1, 1]} : vector<8x16xf32> to vector<8x14xf32>
    %cst_8 = arith.constant 0.000000e+00 : f32
    %23 = vector.broadcast %cst_8 : f32 to vector<8x2xf32>
    %24 = tpu.concatenate %22, %23 in 1 : vector<8x14xf32>, vector<8x2xf32> -> vector<8x16xf32>
    %25 = arith.maximumf %21, %24 : vector<8x16xf32>
    %cst_9 = arith.constant dense<0.000000e+00> : vector<8x4xf32>
    %26 = tpu.matmul %25, %8, %cst_9 {dimension_numbers = #tpu.dot_dimension_numbers<[1], [0], [0], [1], [0, 0, 1, 1], [], []>} : vector<8x16xf32>, vector<16x4xf32>, vector<8x4xf32> -> vector<8x4xf32>
    %27 = vector.broadcast %1 : vector<8x1xf32> to vector<8x4xf32>
    %28 = arith.addf %26, %27 : vector<8x4xf32>
    %cst_10 = arith.constant 0.000000e+00 : f32
    %29 = vector.broadcast %cst_10 : f32 to vector<8x4xf32>
    %30 = arith.maximumf %28, %29 : vector<8x4xf32>
    %c0_11 = arith.constant 0 : index
    %c0_12 = arith.constant 0 : index
    %c0_13 = arith.constant 0 : index
    %31 = vector.load %arg4[%c0_11, %c0_12, %c0_13] : memref<1x8x4xf32, #tpu.memory_space<vmem>>, vector<1x8x4xf32>
    %32 = vector.shape_cast %31 : vector<1x8x4xf32> to vector<8x4xf32>
    %33 = vector.shape_cast %30 : vector<8x4xf32> to vector<1x8x4xf32>
    tpu.vector_store %arg4[%c0_11, %c0_12, %c0_13], %33 {strides = array<i32>} : memref<1x8x4xf32, #tpu.memory_space<vmem>>, vector<1x8x4xf32>,
    return
  }
  func.func @transform_0(%arg0: i32) -> (i32, i32, i32) {
    %c0_i32 = arith.constant 0 : i32
    %c0_i32_0 = arith.constant 0 : i32
    %c0_i32_1 = arith.constant 0 : i32
    return %arg0, %c0_i32, %c0_i32_0 : i32, i32, i32
  }
  func.func @transform_1(%arg0: i32) -> (i32, i32) {
    %c0_i32 = arith.constant 0 : i32
    %c0_i32_0 = arith.constant 0 : i32
    %c0_i32_1 = arith.constant 0 : i32
    return %c0_i32, %c0_i32_0 : i32, i32
  }
  func.func @transform_2(%arg0: i32) -> (i32, i32) {
    %c0_i32 = arith.constant 0 : i32
    %c0_i32_0 = arith.constant 0 : i32
    %c0_i32_1 = arith.constant 0 : i32
    return %c0_i32, %c0_i32_0 : i32, i32
  }
  func.func @transform_3(%arg0: i32) -> (i32, i32, i32) {
    %c0_i32 = arith.constant 0 : i32
    %c0_i32_0 = arith.constant 0 : i32
    %c0_i32_1 = arith.constant 0 : i32
    return %arg0, %c0_i32, %c0_i32_0 : i32, i32, i32
  }
}

</mosaic_0001>

<llo_original>
// kernel: tpu_custom_call.1
$region0: #{tpu_custom_call.1}
  #allocation0 [shape = 'u32[]', space=smem, size = 0x4, offset = 0x4, fixed_abs, tag = 'smem constant byte address 0x4 - core index']
  #allocation1 [shape = 'u32[144,128]{1,0:T(1,128)}', space=vmem, size = 0x12000, scoped, tag = 'internal scratch']
  %s0 = inlined_call_operand.vmem [shape: f32[2,4,16], index: 0, kind: input, shape index: {}]
  %s1 = inlined_call_operand.hbm [shape: f32[8,12], index: 1, kind: input, shape index: {}]
  %s2 = inlined_call_operand.vmem [shape: f32[8,1], index: 2, kind: input, shape index: {}]
  %s3 = inlined_call_operand.vmem [shape: f32[2,8,4], index: 3, kind: output, shape index: {}]
  %s4 = sld [smem:[#allocation0]]
  $region49: #{tpu_custom_call.1} parent=0
    _
  %s6 = ssub.s32 1, %s4
  %s7 = scalar_select 0, %s6, %s4
  $region1: #{tpu_custom_call.1} parent=0
    #allocation2 [shape = 'u8[4096]{0}', space=vmem, size = 0x1000, scoped, tag = 'input window, operand 1, single buffered']
    #allocation3 [shape = 's32[2]{0}', space=sflag, size = 0x8, scoped, tag = 'scoped memory for tpu_custom_call.1']
    %8 = vsyncpa [#allocation3], 0
    loop: start=0, step=1, limit=4
    $region2: #{tpu_custom_call.1} parent=1 // loop_pre_header
      _
    $region3: #{tpu_custom_call.1} parent=1 // loop_header
      %s10 = sphi 0, %s14
      %p11 = scmp.ge.s32.totalorder %s10, 4
      %s20 = sphi 0, %s22
      %s23 = sphi 0, %s20
      %s24 = sphi 0, %s23
      %s40 = sphi 0, %s24
      %s44 = sphi 0, %s44
      %s46 = sphi 0, %s44
      %s47 = sphi 0, %s46
      %s61 = sphi 0, %s47
      %s65 = sphi 0, %s65
      %s67 = sphi 0, %s65
      %s68 = sphi 0, %s67
      %s82 = sphi 0, %s68
      %s88 = sphi 0, %s90
      %s91 = sphi 0, %s88
      %s92 = sphi 0, %s91
      %s108 = sphi 0, %s92
    $region4: #{tpu_custom_call.1} parent=1 // loop_header_branch
      %13 = sbr.rel (%p11) target = $region8
    $region5: #{tpu_custom_call.1} parent=1 // loop_body
      %s15 = ssub.s32 %s10, 1
      %s16 = ssub.s32 %s10, 2
      %s17 = sadd.s32 %s10, 1
      %s18 = ssub.s32 %s10, %s17
      %p19 = scmp.eq.s32.totalorder %s18, 0
      %s21 = sadd.s32 %s20, 1
      %s22 = scalar_select %p19, %s20, %s21
      %p25 = pneg %p19
      %p26 = scmp.eq.s32.totalorder %s10, 1
      %p27 = por %p25, %p26
      %p28 = scmp.ne.s32.totalorder %s20, %s23
      %p29 = scmp.eq.s32.totalorder %s10, 0
      %p30 = por %p28, %p29
      %p31 = scmp.ne.s32.totalorder %s20, %s23
      %p32 = scmp.eq.s32.totalorder %s15, 1
      %p33 = por %p31, %p32
      %p34 = scmp.ne.s32.totalorder %s23, %s24
      %p35 = scmp.eq.s32.totalorder %s15, 0
      %p36 = por %p34, %p35
      %p37 = scmp.ne.s32.totalorder %s23, %s24
      %p38 = scmp.eq.s32.totalorder %s16, 1
      %p39 = por %p37, %p38
      %p41 = scmp.ne.s32.totalorder %s24, %s40
      %p42 = scmp.eq.s32.totalorder %s16, 0
      %p43 = por %p41, %p42
      %s45 = sadd.s32 %s44, 1
      %p48 = scmp.eq.s32.totalorder %s10, 1
      %p49 = scmp.ne.s32.totalorder %s44, %s46
      %p50 = scmp.eq.s32.totalorder %s10, 0
      %p51 = por %p49, %p50
      %p52 = scmp.ne.s32.totalorder %s44, %s46
      %p53 = scmp.eq.s32.totalorder %s15, 1
      %p54 = por %p52, %p53
      %p55 = scmp.ne.s32.totalorder %s46, %s47
      %p56 = scmp.eq.s32.totalorder %s15, 0
      %p57 = por %p55, %p56
      %p58 = scmp.ne.s32.totalorder %s46, %s47
      %p59 = scmp.eq.s32.totalorder %s16, 1
      %p60 = por %p58, %p59
      %p62 = scmp.ne.s32.totalorder %s47, %s61
      %p63 = scmp.eq.s32.totalorder %s16, 0
      %p64 = por %p62, %p63
      %s66 = sadd.s32 %s65, 1
      %p69 = scmp.eq.s32.totalorder %s10, 1
      %p70 = scmp.ne.s32.totalorder %s65, %s67
      %p71 = scmp.eq.s32.totalorder %s10, 0
      %p72 = por %p70, %p71
      %p73 = scmp.ne.s32.totalorder %s65, %s67
      %p74 = scmp.eq.s32.totalorder %s15, 1
      %p75 = por %p73, %p74
      %p76 = scmp.ne.s32.totalorder %s67, %s68
      %p77 = scmp.eq.s32.totalorder %s15, 0
      %p78 = por %p76, %p77
      %p79 = scmp.ne.s32.totalorder %s67, %s68
      %p80 = scmp.eq.s32.totalorder %s16, 1
      %p81 = por %p79, %p80
      %p83 = scmp.ne.s32.totalorder %s68, %s82
      %p84 = scmp.eq.s32.totalorder %s16, 0
      %p85 = por %p83, %p84
      %s86 = ssub.s32 %s10, %s17
      %p87 = scmp.eq.s32.totalorder %s86, 0
      %s89 = sadd.s32 %s88, 1
      %s90 = scalar_select %p87, %s88, %s89
      %p93 = pneg %p87
      %p94 = scmp.eq.s32.totalorder %s10, 1
      %p95 = por %p93, %p94
      %p96 = scmp.ne.s32.totalorder %s88, %s91
      %p97 = scmp.eq.s32.totalorder %s10, 0
      %p98 = por %p96, %p97
      %p99 = scmp.ne.s32.totalorder %s88, %s91
      %p100 = scmp.eq.s32.totalorder %s15, 1
      %p101 = por %p99, %p100
      %p102 = scmp.ne.s32.totalorder %s91, %s92
      %p103 = scmp.eq.s32.totalorder %s15, 0
      %p104 = por %p102, %p103
      %p105 = scmp.ne.s32.totalorder %s91, %s92
      %p106 = scmp.eq.s32.totalorder %s16, 1
      %p107 = por %p105, %p106
      %p109 = scmp.ne.s32.totalorder %s92, %s108
      %p110 = scmp.eq.s32.totalorder %s16, 0
      %p111 = por %p109, %p110
      %p112 = scmp.le.s32.totalorder 1, %s10
      %p113 = scmp.lt.s32.totalorder %s10, 3
      %p114 = pnand %p112, %p113
      %p115 = pneg %p114
      // Predicated region
      $region9: #{tpu_custom_call.1} parent=5 // pred_check
        _
      $region10: #{tpu_custom_call.1} parent=5 // pred_check_branch
        %117 = sbr.rel (%p114) target = $region12
      $region11: #{tpu_custom_call.1} parent=5 // pred_region
        %s118 = ssub.s32 %s10, 1
        // Predicated region
        $region13: #{tpu_custom_call.1} parent=11 // pred_check
          %p119 = pneg %p57
        $region14: #{tpu_custom_call.1} parent=11 // pred_check_branch
          %121 = sbr.rel (%p119) target = $region16
        $region15: #{tpu_custom_call.1} parent=11 // pred_region
          %s123 = ssub.s32 128, 128
          %124 = vsyncadd [#allocation3], %s123
          %s126 = sshll.u32 [#allocation2], 4
          %s127 = int_to_ptr.vmem [resolvable:$true] %s126
          %129 = dma.hbm_to_vmem [thread:$0]  %s1, 128, %s127, [#allocation3]
        $region16: #{tpu_custom_call.1} parent=11 // pred_fallthru
          _
        // Predicated region
        $region17: #{tpu_custom_call.1} parent=11 // pred_check
          %p130 = pneg %p78
        $region18: #{tpu_custom_call.1} parent=11 // pred_check_branch
          %132 = sbr.rel (%p130) target = $region20
        $region19: #{tpu_custom_call.1} parent=11 // pred_region
          _
        $region20: #{tpu_custom_call.1} parent=11 // pred_fallthru
          _
      $region12: #{tpu_custom_call.1} parent=5 // pred_fallthru
        _
      %p133 = scmp.lt.s32.totalorder %s10, 2
      // Predicated region
      $region21: #{tpu_custom_call.1} parent=5 // pred_check
        %p134 = pneg %p133
      $region22: #{tpu_custom_call.1} parent=5 // pred_check_branch
        %136 = sbr.rel (%p134) target = $region24
      $region23: #{tpu_custom_call.1} parent=5 // pred_region
        // Predicated region
        $region25: #{tpu_custom_call.1} parent=23 // pred_check
          %p137 = pneg %p30
        $region26: #{tpu_custom_call.1} parent=23 // pred_check_branch
          %139 = sbr.rel (%p137) target = $region28
        $region27: #{tpu_custom_call.1} parent=23 // pred_region
          %p140 = scmp.lt.s32.totalorder %s10, 1
          %s141 = scalar_select %p140, %s10, 1
          %s142 = smul.addr %s141, 4
          %s143 = scalar_lea.vmem %s0, %s142
        $region28: #{tpu_custom_call.1} parent=23 // pred_fallthru
          _
      $region24: #{tpu_custom_call.1} parent=5 // pred_fallthru
        _
      %p144 = scmp.le.s32.totalorder 1, %s10
      %p145 = scmp.lt.s32.totalorder %s10, 3
      %p146 = pnand %p144, %p145
      %p147 = pneg %p146
      // Predicated region
      $region29: #{tpu_custom_call.1} parent=5 // pred_check
        _
      $region30: #{tpu_custom_call.1} parent=5 // pred_check_branch
        %149 = sbr.rel (%p146) target = $region32
      $region31: #{tpu_custom_call.1} parent=5 // pred_region
        %s150 = ssub.s32 %s10, 1
        // Predicated region
        $region33: #{tpu_custom_call.1} parent=31 // pred_check
          %p151 = pneg %p57
        $region34: #{tpu_custom_call.1} parent=31 // pred_check_branch
          %153 = sbr.rel (%p151) target = $region36
        $region35: #{tpu_custom_call.1} parent=31 // pred_region
          %154 = dma.done [#allocation3], 128
        $region36: #{tpu_custom_call.1} parent=31 // pred_fallthru
          _
        %p155 = scmp.lt.s32.totalorder %s15, 1
        %s156 = scalar_select %p155, %s15, 1
        %s157 = smul.addr %s156, 4
        %s158 = scalar_lea.vmem %s0, %s157
        %p159 = pneg %p36
        %p160 = pneg %p33
        %p161 = pneg %p57
        %p162 = pneg %p54
        %p163 = pneg %p78
        %p164 = pneg %p75
        %p165 = pneg %p104
        %p166 = pneg %p101
        %p167 = scmp.lt.s32.totalorder %s15, 1
        %s168 = scalar_select %p167, %s15, 1
        %s169 = smul.addr %s168, 8
        %s170 = scalar_lea.vmem %s3, %s169
        %p171 = scmp.lt.s32.totalorder %s15, 1
        %s172 = scalar_select %p171, %s15, 1
        %s173 = smul.addr %s172, 4
        %s174 = scalar_lea.vmem %s0, %s173
        %p175 = scmp.lt.s32.totalorder %s15, 1
        %s176 = scalar_select %p175, %s15, 1
        %s177 = smul.addr %s176, 8
        %s178 = scalar_lea.vmem %s3, %s177
        %v179 = vld [vmem:[#allocation2] sm:$0xff]
        %v180 = vld [vmem:[%s2] sm:$0xff]
        %v181 = vlaneseq
        %v182 = vshrl.u32 %v181, 7
        %v183 = vadd.s32 %v182, 8
        %v184 = vlaneseq
        %v185 = vand.u32 %v184, 127
        %v186 = vmul.u32 %v185, 4
        %vm187 = vcmp.eq.s32.totalorder %v182, %v186
        %vm188 = vcmp.eq.s32.totalorder %v183, %v186
        %v189 = vsel %vm187, 1, 0
        %v190 = vsel %vm188, 1, 0
        %v191 = vcvt.s32.f32 %v189
        %v192 = vcvt.s32.f32 %v190
        %v193 = vld [vmem:[%s174] sm:$0xf]
        %195 = vrot.lane.b32.xlu0 %v193, 1
        %v196 = vpop.permute.xlu0 %195
        %vm198 = vcmask 7168
        %v199 = vsel %vm198, 0.0, %v196
        %200 = vrot.lane.b32.xlu0 %v193, 127
        %v201 = vpop.permute.xlu0 %200
        %vm203 = vcmask 121856
        %v204 = vsel %vm203, %v201, 0.0
        %v205 = vrot.slane %v193, 4
        %vm207 = vcmask 1043456
        %v208 = vsel %vm207, %v199, %v205
        %vm209 = vcmask 97280
        %v211 = vsel %vm209, %v179, 0
        %v214 = vsel %vm207, %v204, 0
        %216 = vmatprep.subr.mxu0 0.0
        %217 = vmatpush1.msra.mxu0 0.0
        %218 = vmatprep.subr.mxu0 0.0
        %219 = vmatpush1.msra.mxu0 0.0
        %220 = vmatprep.subr.mxu0 0.0
        %221 = vmatpush1.msra.mxu0 0.0
        %222 = vmatprep.subr.mxu0 0.0
        %223 = vmatpush1.msra.mxu0 0.0
        %224 = vmatprep.subr.mxu0 0.0
        %225 = vmatpush1.msra.mxu0 0.0
        %226 = vmatprep.subr.mxu0 0.0
        %227 = vmatpush1.msra.mxu0 0.0
        %228 = vmatprep.subr.mxu0 0.0
        %229 = vmatpush1.msra.mxu0 0.0
        %230 = vmatprep.subr.mxu0 0.0
        %231 = vmatpush1.msra.mxu0 0.0
        %232 = vmatprep.subr.mxu0 0.0
        %233 = vmatpush1.msra.mxu0 0.0
        %234 = vmatprep.subr.mxu0 0.0
        %235 = vmatpush1.msra.mxu0 0.0
        %236 = vmatprep.subr.mxu0 0.0
        %237 = vmatpush1.msra.mxu0 0.0
        %238 = vmatprep.subr.mxu0 0.0
        %239 = vmatpush1.msra.mxu0 0.0
        %240 = vmatprep.subr.mxu0 0.0
        %241 = vmatpush1.msra.mxu0 0.0
        %242 = vmatprep.subr.mxu0 0.0
        %243 = vmatpush1.msra.mxu0 0.0
        %244 = vmatprep.subr.mxu0 0.0
        %245 = vmatpush1.msra.mxu0 %v214
        %246 = vmatprep.subr.mxu0 0.0
        %247 = vmatpush1.msra.mxu0 %v208
        %248 = vmatprep.subr.mxu0 0.0
        %249 = vmatpush2.msra.mxu0 0.0
        %250 = vmatprep.subr.mxu0 0.0
        %251 = vmatpush2.msra.mxu0 0.0
        %252 = vmatprep.subr.mxu0 0.0
        %253 = vmatpush2.msra.mxu0 0.0
        %254 = vmatprep.subr.mxu0 0.0
        %255 = vmatpush2.msra.mxu0 0.0
        %256 = vmatprep.subr.mxu0 0.0
        %257 = vmatpush2.msra.mxu0 0.0
        %258 = vmatprep.subr.mxu0 0.0
        %259 = vmatpush2.msra.mxu0 0.0
        %260 = vmatprep.subr.mxu0 0.0
        %261 = vmatpush2.msra.mxu0 0.0
        %262 = vmatprep.subr.mxu0 0.0
        %263 = vmatpush2.msra.mxu0 0.0
        %264 = vmatprep.subr.mxu0 0.0
        %265 = vmatpush2.msra.mxu0 0.0
        %266 = vmatprep.subr.mxu0 0.0
        %267 = vmatpush2.msra.mxu0 0.0
        %268 = vmatprep.subr.mxu0 0.0
        %269 = vmatpush2.msra.mxu0 0.0
        %270 = vmatprep.subr.mxu0 0.0
        %271 = vmatpush2.msra.mxu0 0.0
        %272 = vmatprep.subr.mxu0 0.0
        %273 = vmatpush2.msra.mxu0 0.0
        %274 = vmatprep.subr.mxu0 0.0
        %275 = vmatpush2.msra.mxu0 0.0
        %276 = vmatprep.subr.mxu0 0.0
        %277 = vmatpush2.msra.mxu0 0.0
        %278 = vmatprep.subr.mxu0 0.0
        %279 = vmatpush2.msra.mxu0 0.0
        %280 = vmatprep.mubr.f32.mxu0 0.0
        %281 = vmatmul.mubr.f32.gmra.mxu0 %v211
        %v282 = vpop.f32.mrf.mxu0
        %v283 = vadd.f32 0.0, %v282
        %v284 = vpop.f32.mrf.mxu0
        %285 = vdwg.mxu0
        %287 = vrot.lane.b32.xlu0 %v283, 127
        %v288 = vpop.permute.xlu0 %287
        %v290 = vsel %vm203, %v288, 0.0
        %v291 = vmax.f32 %v283, %v290
        %293 = vrot.lane.b32.xlu0 %v291, 126
        %v294 = vpop.permute.xlu0 %293
        %vm296 = vcmask 113664
        %v297 = vsel %vm296, %v294, 0.0
        %v298 = vmax.f32 %v291, %v297
        %300 = vset.pattern.permute.xlu0 0
        %301 = vperm.xlu0 %300, %v180
        %v302 = vpop.permute.xlu0 %301
        %vm304 = vcmask 130048
        %v306 = vsel %vm304, %v298, 0
        %308 = vmatprep.subr.mxu0 0.0
        %309 = vmatpush1.msra.mxu0 0.0
        %310 = vmatprep.subr.mxu0 0.0
        %311 = vmatpush1.msra.mxu0 0.0
        %312 = vmatprep.subr.mxu0 0.0
        %313 = vmatpush1.msra.mxu0 0.0
        %314 = vmatprep.subr.mxu0 0.0
        %315 = vmatpush1.msra.mxu0 0.0
        %316 = vmatprep.subr.mxu0 0.0
        %317 = vmatpush1.msra.mxu0 0.0
        %318 = vmatprep.subr.mxu0 0.0
        %319 = vmatpush1.msra.mxu0 0.0
        %320 = vmatprep.subr.mxu0 0.0
        %321 = vmatpush1.msra.mxu0 0.0
        %322 = vmatprep.subr.mxu0 0.0
        %323 = vmatpush1.msra.mxu0 0.0
        %324 = vmatprep.subr.mxu0 0.0
        %325 = vmatpush1.msra.mxu0 0.0
        %326 = vmatprep.subr.mxu0 0.0
        %327 = vmatpush1.msra.mxu0 0.0
        %328 = vmatprep.subr.mxu0 0.0
        %329 = vmatpush1.msra.mxu0 0.0
        %330 = vmatprep.subr.mxu0 0.0
        %331 = vmatpush1.msra.mxu0 0.0
        %332 = vmatprep.subr.mxu0 0.0
        %333 = vmatpush1.msra.mxu0 0.0
        %334 = vmatprep.subr.mxu0 0.0
        %335 = vmatpush1.msra.mxu0 0.0
        %336 = vmatprep.subr.mxu0 0.0
        %337 = vmatpush1.msra.mxu0 %v192
        %338 = vmatprep.subr.mxu0 0.0
        %339 = vmatpush1.msra.mxu0 %v191
        %340 = vmatprep.subr.mxu0 0.0
        %341 = vmatpush2.msra.mxu0 0.0
        %342 = vmatprep.subr.mxu0 0.0
        %343 = vmatpush2.msra.mxu0 0.0
        %344 = vmatprep.subr.mxu0 0.0
        %345 = vmatpush2.msra.mxu0 0.0
        %346 = vmatprep.subr.mxu0 0.0
        %347 = vmatpush2.msra.mxu0 0.0
        %348 = vmatprep.subr.mxu0 0.0
        %349 = vmatpush2.msra.mxu0 0.0
        %350 = vmatprep.subr.mxu0 0.0
        %351 = vmatpush2.msra.mxu0 0.0
        %352 = vmatprep.subr.mxu0 0.0
        %353 = vmatpush2.msra.mxu0 0.0
        %354 = vmatprep.subr.mxu0 0.0
        %355 = vmatpush2.msra.mxu0 0.0
        %356 = vmatprep.subr.mxu0 0.0
        %357 = vmatpush2.msra.mxu0 0.0
        %358 = vmatprep.subr.mxu0 0.0
        %359 = vmatpush2.msra.mxu0 0.0
        %360 = vmatprep.subr.mxu0 0.0
        %361 = vmatpush2.msra.mxu0 0.0
        %362 = vmatprep.subr.mxu0 0.0
        %363 = vmatpush2.msra.mxu0 0.0
        %364 = vmatprep.subr.mxu0 0.0
        %365 = vmatpush2.msra.mxu0 0.0
        %366 = vmatprep.subr.mxu0 0.0
        %367 = vmatpush2.msra.mxu0 0.0
        %368 = vmatprep.subr.mxu0 0.0
        %369 = vmatpush2.msra.mxu0 0.0
        %370 = vmatprep.subr.mxu0 0.0
        %371 = vmatpush2.msra.mxu0 0.0
        %372 = vmatprep.mubr.f32.mxu0 0.0
        %373 = vmatmul.mubr.f32.gmra.mxu0 %v306
        %v374 = vpop.f32.mrf.mxu0
        %v375 = vadd.f32 %v302, %v374
        %v376 = vpop.f32.mrf.mxu0
        %377 = vdwg.mxu0
        %v378 = vmax.f32 %v375, 0.0
        %vm379 = vcmask 31744
        %380 = vst.msk [vmem:[%s178] sm:$0xff] %vm379, %v378
        %p381 = scmp.lt.s32.totalorder %s15, 1
        %s382 = scalar_select %p381, %s15, 1
        %s383 = smul.addr %s382, 8
        %s384 = scalar_lea.vmem %s3, %s383
        // Predicated region
        $region37: #{tpu_custom_call.1} parent=31 // pred_check
          %p385 = pneg %p101
        $region38: #{tpu_custom_call.1} parent=31 // pred_check_branch
          %387 = sbr.rel (%p385) target = $region40
        $region39: #{tpu_custom_call.1} parent=31 // pred_region
          _
        $region40: #{tpu_custom_call.1} parent=31 // pred_fallthru
          _
      $region32: #{tpu_custom_call.1} parent=5 // pred_fallthru
        _
      %p388 = scmp.le.s32.totalorder 2, %s10
      // Predicated region
      $region41: #{tpu_custom_call.1} parent=5 // pred_check
        %p389 = pneg %p388
      $region42: #{tpu_custom_call.1} parent=5 // pred_check_branch
        %391 = sbr.rel (%p389) target = $region44
      $region43: #{tpu_custom_call.1} parent=5 // pred_region
        %s392 = ssub.s32 %s10, 2
        // Predicated region
        $region45: #{tpu_custom_call.1} parent=43 // pred_check
          %p393 = pneg %p107
        $region46: #{tpu_custom_call.1} parent=43 // pred_check_branch
          %395 = sbr.rel (%p393) target = $region48
        $region47: #{tpu_custom_call.1} parent=43 // pred_region
          %p396 = scmp.lt.s32.totalorder %s16, 1
          %s397 = scalar_select %p396, %s16, 1
          %s398 = smul.addr %s397, 8
          %s399 = scalar_lea.vmem %s3, %s398
        $region48: #{tpu_custom_call.1} parent=43 // pred_fallthru
          _
      $region44: #{tpu_custom_call.1} parent=5 // pred_fallthru
        _
    $region6: #{tpu_custom_call.1} parent=1 // loop_footer
      %s14 = sadd.s32 1, %s10
    $region7: #{tpu_custom_call.1} parent=1 // loop_footer_branch
      %9 = sbr.rel target = $region3
    $region8: #{tpu_custom_call.1} parent=1 // loop_exit
      _
    %400 = vsyncpa [#allocation3], 1
    %s401 = scalar_lea.sflag [#allocation3], 1
    %402 = vsyncpa %s401, 1

</llo_original>
